<compile_context>
chip_gen: v7x
topology: tpu7x:2x2x1
jax: 0.10.0
libtpu: 0.0.40
codegen_flags: <defaults>
</compile_context>

<pallas_src>
import jax
import jax.numpy as jnp
from jax.experimental import pallas as pl
from jax.experimental.pallas import tpu as pltpu

DEFAULT_TM = 1024   # batch tile; ~20 MiB VMEM footprint at N<=1024, fits 32 MiB scoped limit


def _classifier_kernel(x_ref, w_ref, b_ref, o_ref):
    # x_ref: (tm, K) f32/bf16 | w_ref: (K, N) bf16 | b_ref: (1, N) f32 | o_ref: (tm, N)
    x = x_ref[...].astype(w_ref.dtype)          # in-kernel VPU cast; no extra HBM pass for x
    acc = jnp.dot(x, w_ref[...], preferred_element_type=jnp.float32)   # MXU, f32 accumulate
    o_ref[...] = (acc + b_ref[...]).astype(o_ref.dtype)                # f32 bias epilogue


def prepare_classifier_params(weight, bias, compute_dtype=jnp.bfloat16):
    """One-time (model-load) parameter prep.

    Args:
      weight: (num_classes, 1280) f32, PyTorch nn.Linear layout.
      bias:   (num_classes,) f32.
    Returns:
      w_t: (1280, num_classes) compute_dtype, transposed once here (never per forward).
      b:   (1, num_classes) f32.
    No N padding: the MXU lane-pads N internally, the output stays exactly
    (B, num_classes) so no post-call slice and no -inf sentinel bias columns are needed.
    """
    n, k = weight.shape
    w_t = jnp.asarray(weight, jnp.float32).T.astype(compute_dtype)   # (K, N)
    b = jnp.asarray(bias, jnp.float32).reshape(1, n)                  # (1, N) f32
    return w_t, b


def _round_up(v, m):
    return ((v + m - 1) // m) * m


def _pick_tm(batch, tm_max):
    tm = min(tm_max, batch)
    if tm < batch:
        tm = max(8, (tm // 8) * 8)              # sublane (8) alignment for partial-B tiles
    # v7x megacore: with a single batch tile the second TensorCore idles. Split the batch
    # into >= 2 tiles when it is big enough to be worth the extra grid step.
    if batch >= 128 and pl.cdiv(batch, tm) < 2:
        tm = _round_up(pl.cdiv(batch, 2), 8)
    return tm


def efficientnet_classifier(x, w_t, b, *, tm=DEFAULT_TM, out_dtype=jnp.float32):
    """y = Dropout_eval(x) @ W^T + b   (eval-mode dropout = identity).

    Args:
      x:   (B, 1280) float32 or bfloat16 — NOT pre-cast in the wrapper; the kernel casts.
      w_t: (1280, num_classes) bf16 from prepare_classifier_params.
      b:   (1, num_classes) f32 from prepare_classifier_params.
      out_dtype: jnp.float32 (default, matches PyTorch) or jnp.bfloat16 to halve logit
                 writeback on bandwidth-bound chips (v5e); accumulation stays f32 either way.
    Returns:
      (B, num_classes) logits in out_dtype.
    """
    B, K = x.shape
    Kw, N = w_t.shape
    assert K == Kw, "feature dim mismatch"

    tm = _pick_tm(B, tm)
    grid = (pl.cdiv(B, tm),)

    bytes_accessed = (x.size * x.dtype.itemsize
                      + w_t.size * w_t.dtype.itemsize
                      + b.size * b.dtype.itemsize
                      + B * N * jnp.dtype(out_dtype).itemsize)
    cost = pl.CostEstimate(flops=2 * B * K * N,
                           transcendentals=0,
                           bytes_accessed=bytes_accessed)

    return pl.pallas_call(
        _classifier_kernel,
        out_shape=jax.ShapeDtypeStruct((B, N), out_dtype),
        grid=grid,
        in_specs=[
            # x tile, pipelined (double-buffered) over the batch.
            pl.BlockSpec((tm, K), lambda i: (i, 0)),
            # Weight / bias: constant index_map -> fetched once; single-buffered to save VMEM.
            pl.BlockSpec((K, N), lambda i: (0, 0), pipeline_mode=pl.Buffered(buffer_count=1)),
            pl.BlockSpec((1, N), lambda i: (0, 0), pipeline_mode=pl.Buffered(buffer_count=1)),
        ],
        out_specs=pl.BlockSpec((tm, N), lambda i: (i, 0)),
        compiler_params=pltpu.CompilerParams(
            dimension_semantics=("parallel",),      # only matters on v7x (2 TCs); neutral on v5e/v6e
            vmem_limit_bytes=32 * 1024 * 1024,
        ),
        cost_estimate=cost,
    )(x, w_t, b)


def _reference_f32(x, weight, bias):
    return x @ weight.T + bias


if __name__ == "__main__":
    key = jax.random.PRNGKey(0)
    k_x, k_w, k_b = jax.random.split(key, 3)

    batch = 8
    in_features = 1280
    num_classes = 16

    # Deterministic parameter init (mimics nn.Linear's U(-1/sqrt(fan_in), 1/sqrt(fan_in)))
    bound = 1.0 / (in_features ** 0.5)
    weight = jax.random.uniform(k_w, (num_classes, in_features),
                                dtype=jnp.float32, minval=-bound, maxval=bound)
    bias = jax.random.uniform(k_b, (num_classes,),
                              dtype=jnp.float32, minval=-bound, maxval=bound)
    x = jax.random.normal(k_x, (batch, in_features), dtype=jnp.float32)

    # One-time parameter prep (transpose + bf16 cast), then the kernel call (x stays f32).
    w_t, b = prepare_classifier_params(weight, bias)
    out = efficientnet_classifier(x, w_t, b)
    out = jax.block_until_ready(out)

    ref = _reference_f32(x, weight, bias)
    assert out.shape == (batch, num_classes)
    # bf16 matmul over K=1280 with f32 accumulation: ~1e-3..1e-2 absolute error vs f32.
    assert jnp.allclose(out, ref, atol=2e-2, rtol=2e-2), "mismatch vs reference"

    print("KERNEL_OK")
</pallas_src>

<mosaic_0001>
module attributes {stable_mosaic.version = 11 : i64} {
  func.func @_classifier_kernel(%arg0: i32, %arg1: memref<8x1280xf32, #tpu.memory_space<vmem>>, %arg2: memref<1280x16xbf16, #tpu.memory_space<vmem>>, %arg3: memref<1x16xf32, #tpu.memory_space<vmem>>, %arg4: memref<8x16xf32, #tpu.memory_space<vmem>>) attributes {dimension_semantics = [#tpu.dimension_semantics<parallel>], iteration_bounds = array<i64: 1>, scalar_prefetch = 0 : i64, scratch_operands = 0 : i64, tpu.core_type = #tpu.core_type<tc>, window_params = [{transform_indices = @transform_0, window_bounds = array<i64: 8, 1280>}, {pipeline_mode = #tpu.pipeline_mode<synchronous>, transform_indices = @transform_1, window_bounds = array<i64: 1280, 16>}, {pipeline_mode = #tpu.pipeline_mode<synchronous>, transform_indices = @transform_2, window_bounds = array<i64: 1, 16>}, {transform_indices = @transform_3, window_bounds = array<i64: 8, 16>}]} {
    %c0 = arith.constant 0 : index
    %c0_0 = arith.constant 0 : index
    %0 = vector.load %arg1[%c0, %c0_0] : memref<8x1280xf32, #tpu.memory_space<vmem>>, vector<8x1280xf32>
    %1 = arith.truncf %0 : vector<8x1280xf32> to vector<8x1280xbf16>
    %c0_1 = arith.constant 0 : index
    %c0_2 = arith.constant 0 : index
    %2 = vector.load %arg2[%c0_1, %c0_2] : memref<1280x16xbf16, #tpu.memory_space<vmem>>, vector<1280x16xbf16>
    %cst = arith.constant dense<0.000000e+00> : vector<8x16xf32>
    %3 = tpu.matmul %1, %2, %cst {dimension_numbers = #tpu.dot_dimension_numbers<[1], [0], [0], [1], [0, 0, 1, 1], [], []>} : vector<8x1280xbf16>, vector<1280x16xbf16>, vector<8x16xf32> -> vector<8x16xf32>
    %c0_3 = arith.constant 0 : index
    %c0_4 = arith.constant 0 : index
    %4 = vector.load %arg3[%c0_3, %c0_4] : memref<1x16xf32, #tpu.memory_space<vmem>>, vector<1x16xf32>
    %5 = vector.broadcast %4 : vector<1x16xf32> to vector<8x16xf32>
    %6 = arith.addf %3, %5 : vector<8x16xf32>
    %c0_5 = arith.constant 0 : index
    %c0_6 = arith.constant 0 : index
    %7 = vector.load %arg4[%c0_5, %c0_6] : memref<8x16xf32, #tpu.memory_space<vmem>>, vector<8x16xf32>
    tpu.vector_store %arg4[%c0_5, %c0_6], %6 {strides = array<i32>} : memref<8x16xf32, #tpu.memory_space<vmem>>, vector<8x16xf32>,
    return
  }
  func.func @transform_0(%arg0: i32) -> (i32, i32) {
    %c0_i32 = arith.constant 0 : i32
    %c0_i32_0 = arith.constant 0 : i32
    return %arg0, %c0_i32 : i32, i32
  }
  func.func @transform_1(%arg0: i32) -> (i32, i32) {
    %c0_i32 = arith.constant 0 : i32
    %c0_i32_0 = arith.constant 0 : i32
    %c0_i32_1 = arith.constant 0 : i32
    return %c0_i32, %c0_i32_0 : i32, i32
  }
  func.func @transform_2(%arg0: i32) -> (i32, i32) {
    %c0_i32 = arith.constant 0 : i32
    %c0_i32_0 = arith.constant 0 : i32
    %c0_i32_1 = arith.constant 0 : i32
    return %c0_i32, %c0_i32_0 : i32, i32
  }
  func.func @transform_3(%arg0: i32) -> (i32, i32) {
    %c0_i32 = arith.constant 0 : i32
    %c0_i32_0 = arith.constant 0 : i32
    return %arg0, %c0_i32 : i32, i32
  }
}

</mosaic_0001>

<llo_original>
// kernel: tpu_custom_call.1
$region0: #{tpu_custom_call.1}
  #allocation0 [shape = 'u32[]', space=smem, size = 0x4, offset = 0x4, fixed_abs, tag = 'smem constant byte address 0x4 - core index']
  #allocation1 [shape = 'u32[144,128]{1,0:T(1,128)}', space=vmem, size = 0x12000, scoped, tag = 'internal scratch']
  %s0 = inlined_call_operand.vmem [shape: f32[8,1280], index: 0, kind: input, shape index: {}]
  %s1 = inlined_call_operand.vmem [shape: bf16[1280,16], index: 1, kind: input, shape index: {}]
  %s2 = inlined_call_operand.vmem [shape: f32[1,16], index: 2, kind: input, shape index: {}]
  %s3 = inlined_call_operand.hbm [shape: f32[8,16], index: 3, kind: output, shape index: {}]
  %s4 = sld [smem:[#allocation0]]
  $region22: #{tpu_custom_call.1} parent=0
    _
  %s6 = ssub.s32 1, %s4
  %s7 = scalar_select 0, %s6, %s4
  $region1: #{tpu_custom_call.1} parent=0
    #allocation2 [shape = 'u8[4096]{0}', space=vmem, size = 0x1000, scoped, tag = 'output window, operand 0, single buffered']
    #allocation3 [shape = 's32[1]{0}', space=sflag, size = 0x4, scoped, tag = 'scoped memory for tpu_custom_call.1']
    %8 = vsyncpa [#allocation3], 0
    // Predicated region
    $region2: #{tpu_custom_call.1} parent=1 // pred_check
      _
    $region3: #{tpu_custom_call.1} parent=1 // pred_check_branch
      %10 = sbr.rel (0) target = $region5
    $region4: #{tpu_custom_call.1} parent=1 // pred_region
      _
    $region5: #{tpu_custom_call.1} parent=1 // pred_fallthru
      _
    // Predicated region
    $region6: #{tpu_custom_call.1} parent=1 // pred_check
      _
    $region7: #{tpu_custom_call.1} parent=1 // pred_check_branch
      %12 = sbr.rel (0) target = $region9
    $region8: #{tpu_custom_call.1} parent=1 // pred_region
      _
    $region9: #{tpu_custom_call.1} parent=1 // pred_fallthru
      _
    // Predicated region
    $region10: #{tpu_custom_call.1} parent=1 // pred_check
      _
    $region11: #{tpu_custom_call.1} parent=1 // pred_check_branch
      %14 = sbr.rel (0) target = $region13
    $region12: #{tpu_custom_call.1} parent=1 // pred_region
      _
    $region13: #{tpu_custom_call.1} parent=1 // pred_fallthru
      _
    %v16 = vld [vmem:[%s0] sm:$0xff]
    %v17 = vld [vmem:[%s0 + $0x8] sm:$0xff]
    %v18 = vld [vmem:[%s0 + $0x10] sm:$0xff]
    %v19 = vld [vmem:[%s0 + $0x18] sm:$0xff]
    %v20 = vld [vmem:[%s0 + $0x20] sm:$0xff]
    %v21 = vld [vmem:[%s0 + $0x28] sm:$0xff]
    %v22 = vld [vmem:[%s0 + $0x30] sm:$0xff]
    %v23 = vld [vmem:[%s0 + $0x38] sm:$0xff]
    %v24 = vld [vmem:[%s0 + $0x40] sm:$0xff]
    %v25 = vld [vmem:[%s0 + $0x48] sm:$0xff]
    %v26 = vpack.c.bf16 %v16, %v16
    %v27 = vpack.c.bf16 %v17, %v17
    %v28 = vpack.c.bf16 %v18, %v18
    %v29 = vpack.c.bf16 %v19, %v19
    %v30 = vpack.c.bf16 %v20, %v20
    %v31 = vpack.c.bf16 %v21, %v21
    %v32 = vpack.c.bf16 %v22, %v22
    %v33 = vpack.c.bf16 %v23, %v23
    %v34 = vpack.c.bf16 %v24, %v24
    %v35 = vpack.c.bf16 %v25, %v25
    %v36 = vld [vmem:[%s1] sm:$0xf]
    %v37 = vld [vmem:[%s1 + $0x4] sm:$0xf]
    %v38 = vld [vmem:[%s1 + $0x8] sm:$0xf]
    %v39 = vld [vmem:[%s1 + $0xc] sm:$0xf]
    %v40 = vld [vmem:[%s1 + $0x10] sm:$0xf]
    %v41 = vld [vmem:[%s1 + $0x14] sm:$0xf]
    %v42 = vld [vmem:[%s1 + $0x18] sm:$0xf]
    %v43 = vld [vmem:[%s1 + $0x1c] sm:$0xf]
    %v44 = vld [vmem:[%s1 + $0x20] sm:$0xf]
    %v45 = vld [vmem:[%s1 + $0x24] sm:$0xf]
    %v46 = vld [vmem:[%s1 + $0x28] sm:$0xf]
    %v47 = vld [vmem:[%s1 + $0x2c] sm:$0xf]
    %v48 = vld [vmem:[%s1 + $0x30] sm:$0xf]
    %v49 = vld [vmem:[%s1 + $0x34] sm:$0xf]
    %v50 = vld [vmem:[%s1 + $0x38] sm:$0xf]
    %v51 = vld [vmem:[%s1 + $0x3c] sm:$0xf]
    %v52 = vld [vmem:[%s1 + $0x40] sm:$0xf]
    %v53 = vld [vmem:[%s1 + $0x44] sm:$0xf]
    %v54 = vld [vmem:[%s1 + $0x48] sm:$0xf]
    %v55 = vld [vmem:[%s1 + $0x4c] sm:$0xf]
    %v56 = vld [vmem:[%s1 + $0x50] sm:$0xf]
    %v57 = vld [vmem:[%s1 + $0x54] sm:$0xf]
    %v58 = vld [vmem:[%s1 + $0x58] sm:$0xf]
    %v59 = vld [vmem:[%s1 + $0x5c] sm:$0xf]
    %v60 = vld [vmem:[%s1 + $0x60] sm:$0xf]
    %v61 = vld [vmem:[%s1 + $0x64] sm:$0xf]
    %v62 = vld [vmem:[%s1 + $0x68] sm:$0xf]
    %v63 = vld [vmem:[%s1 + $0x6c] sm:$0xf]
    %v64 = vld [vmem:[%s1 + $0x70] sm:$0xf]
    %v65 = vld [vmem:[%s1 + $0x74] sm:$0xf]
    %v66 = vld [vmem:[%s1 + $0x78] sm:$0xf]
    %v67 = vld [vmem:[%s1 + $0x7c] sm:$0xf]
    %v68 = vld [vmem:[%s1 + $0x80] sm:$0xf]
    %v69 = vld [vmem:[%s1 + $0x84] sm:$0xf]
    %v70 = vld [vmem:[%s1 + $0x88] sm:$0xf]
    %v71 = vld [vmem:[%s1 + $0x8c] sm:$0xf]
    %v72 = vld [vmem:[%s1 + $0x90] sm:$0xf]
    %v73 = vld [vmem:[%s1 + $0x94] sm:$0xf]
    %v74 = vld [vmem:[%s1 + $0x98] sm:$0xf]
    %v75 = vld [vmem:[%s1 + $0x9c] sm:$0xf]
    %v76 = vld [vmem:[%s1 + $0xa0] sm:$0xf]
    %v77 = vld [vmem:[%s1 + $0xa4] sm:$0xf]
    %v78 = vld [vmem:[%s1 + $0xa8] sm:$0xf]
    %v79 = vld [vmem:[%s1 + $0xac] sm:$0xf]
    %v80 = vld [vmem:[%s1 + $0xb0] sm:$0xf]
    %v81 = vld [vmem:[%s1 + $0xb4] sm:$0xf]
    %v82 = vld [vmem:[%s1 + $0xb8] sm:$0xf]
    %v83 = vld [vmem:[%s1 + $0xbc] sm:$0xf]
    %v84 = vld [vmem:[%s1 + $0xc0] sm:$0xf]
    %v85 = vld [vmem:[%s1 + $0xc4] sm:$0xf]
    %v86 = vld [vmem:[%s1 + $0xc8] sm:$0xf]
    %v87 = vld [vmem:[%s1 + $0xcc] sm:$0xf]
    %v88 = vld [vmem:[%s1 + $0xd0] sm:$0xf]
    %v89 = vld [vmem:[%s1 + $0xd4] sm:$0xf]
    %v90 = vld [vmem:[%s1 + $0xd8] sm:$0xf]
    %v91 = vld [vmem:[%s1 + $0xdc] sm:$0xf]
    %v92 = vld [vmem:[%s1 + $0xe0] sm:$0xf]
    %v93 = vld [vmem:[%s1 + $0xe4] sm:$0xf]
    %v94 = vld [vmem:[%s1 + $0xe8] sm:$0xf]
    %v95 = vld [vmem:[%s1 + $0xec] sm:$0xf]
    %v96 = vld [vmem:[%s1 + $0xf0] sm:$0xf]
    %v97 = vld [vmem:[%s1 + $0xf4] sm:$0xf]
    %v98 = vld [vmem:[%s1 + $0xf8] sm:$0xf]
    %v99 = vld [vmem:[%s1 + $0xfc] sm:$0xf]
    %v100 = vld [vmem:[%s1 + $0x100] sm:$0xf]
    %v101 = vld [vmem:[%s1 + $0x104] sm:$0xf]
    %v102 = vld [vmem:[%s1 + $0x108] sm:$0xf]
    %v103 = vld [vmem:[%s1 + $0x10c] sm:$0xf]
    %v104 = vld [vmem:[%s1 + $0x110] sm:$0xf]
    %v105 = vld [vmem:[%s1 + $0x114] sm:$0xf]
    %v106 = vld [vmem:[%s1 + $0x118] sm:$0xf]
    %v107 = vld [vmem:[%s1 + $0x11c] sm:$0xf]
    %v108 = vld [vmem:[%s1 + $0x120] sm:$0xf]
    %v109 = vld [vmem:[%s1 + $0x124] sm:$0xf]
    %v110 = vld [vmem:[%s1 + $0x128] sm:$0xf]
    %v111 = vld [vmem:[%s1 + $0x12c] sm:$0xf]
    %v112 = vld [vmem:[%s1 + $0x130] sm:$0xf]
    %v113 = vld [vmem:[%s1 + $0x134] sm:$0xf]
    %v114 = vld [vmem:[%s1 + $0x138] sm:$0xf]
    %v115 = vld [vmem:[%s1 + $0x13c] sm:$0xf]
    %v116 = vld [vmem:[%s1 + $0x140] sm:$0xf]
    %v117 = vld [vmem:[%s1 + $0x144] sm:$0xf]
    %v118 = vld [vmem:[%s1 + $0x148] sm:$0xf]
    %v119 = vld [vmem:[%s1 + $0x14c] sm:$0xf]
    %v120 = vld [vmem:[%s1 + $0x150] sm:$0xf]
    %v121 = vld [vmem:[%s1 + $0x154] sm:$0xf]
    %v122 = vld [vmem:[%s1 + $0x158] sm:$0xf]
    %v123 = vld [vmem:[%s1 + $0x15c] sm:$0xf]
    %v124 = vld [vmem:[%s1 + $0x160] sm:$0xf]
    %v125 = vld [vmem:[%s1 + $0x164] sm:$0xf]
    %v126 = vld [vmem:[%s1 + $0x168] sm:$0xf]
    %v127 = vld [vmem:[%s1 + $0x16c] sm:$0xf]
    %v128 = vld [vmem:[%s1 + $0x170] sm:$0xf]
    %v129 = vld [vmem:[%s1 + $0x174] sm:$0xf]
    %v130 = vld [vmem:[%s1 + $0x178] sm:$0xf]
    %v131 = vld [vmem:[%s1 + $0x17c] sm:$0xf]
    %v132 = vld [vmem:[%s1 + $0x180] sm:$0xf]
    %v133 = vld [vmem:[%s1 + $0x184] sm:$0xf]
    %v134 = vld [vmem:[%s1 + $0x188] sm:$0xf]
    %v135 = vld [vmem:[%s1 + $0x18c] sm:$0xf]
    %v136 = vld [vmem:[%s1 + $0x190] sm:$0xf]
    %v137 = vld [vmem:[%s1 + $0x194] sm:$0xf]
    %v138 = vld [vmem:[%s1 + $0x198] sm:$0xf]
    %v139 = vld [vmem:[%s1 + $0x19c] sm:$0xf]
    %v140 = vld [vmem:[%s1 + $0x1a0] sm:$0xf]
    %v141 = vld [vmem:[%s1 + $0x1a4] sm:$0xf]
    %v142 = vld [vmem:[%s1 + $0x1a8] sm:$0xf]
    %v143 = vld [vmem:[%s1 + $0x1ac] sm:$0xf]
    %v144 = vld [vmem:[%s1 + $0x1b0] sm:$0xf]
    %v145 = vld [vmem:[%s1 + $0x1b4] sm:$0xf]
    %v146 = vld [vmem:[%s1 + $0x1b8] sm:$0xf]
    %v147 = vld [vmem:[%s1 + $0x1bc] sm:$0xf]
    %v148 = vld [vmem:[%s1 + $0x1c0] sm:$0xf]
    %v149 = vld [vmem:[%s1 + $0x1c4] sm:$0xf]
    %v150 = vld [vmem:[%s1 + $0x1c8] sm:$0xf]
    %v151 = vld [vmem:[%s1 + $0x1cc] sm:$0xf]
    %v152 = vld [vmem:[%s1 + $0x1d0] sm:$0xf]
    %v153 = vld [vmem:[%s1 + $0x1d4] sm:$0xf]
    %v154 = vld [vmem:[%s1 + $0x1d8] sm:$0xf]
    %v155 = vld [vmem:[%s1 + $0x1dc] sm:$0xf]
    %v156 = vld [vmem:[%s1 + $0x1e0] sm:$0xf]
    %v157 = vld [vmem:[%s1 + $0x1e4] sm:$0xf]
    %v158 = vld [vmem:[%s1 + $0x1e8] sm:$0xf]
    %v159 = vld [vmem:[%s1 + $0x1ec] sm:$0xf]
    %v160 = vld [vmem:[%s1 + $0x1f0] sm:$0xf]
    %v161 = vld [vmem:[%s1 + $0x1f4] sm:$0xf]
    %v162 = vld [vmem:[%s1 + $0x1f8] sm:$0xf]
    %v163 = vld [vmem:[%s1 + $0x1fc] sm:$0xf]
    %v164 = vld [vmem:[%s1 + $0x200] sm:$0xf]
    %v165 = vld [vmem:[%s1 + $0x204] sm:$0xf]
    %v166 = vld [vmem:[%s1 + $0x208] sm:$0xf]
    %v167 = vld [vmem:[%s1 + $0x20c] sm:$0xf]
    %v168 = vld [vmem:[%s1 + $0x210] sm:$0xf]
    %v169 = vld [vmem:[%s1 + $0x214] sm:$0xf]
    %v170 = vld [vmem:[%s1 + $0x218] sm:$0xf]
    %v171 = vld [vmem:[%s1 + $0x21c] sm:$0xf]
    %v172 = vld [vmem:[%s1 + $0x220] sm:$0xf]
    %v173 = vld [vmem:[%s1 + $0x224] sm:$0xf]
    %v174 = vld [vmem:[%s1 + $0x228] sm:$0xf]
    %v175 = vld [vmem:[%s1 + $0x22c] sm:$0xf]
    %v176 = vld [vmem:[%s1 + $0x230] sm:$0xf]
    %v177 = vld [vmem:[%s1 + $0x234] sm:$0xf]
    %v178 = vld [vmem:[%s1 + $0x238] sm:$0xf]
    %v179 = vld [vmem:[%s1 + $0x23c] sm:$0xf]
    %v180 = vld [vmem:[%s1 + $0x240] sm:$0xf]
    %v181 = vld [vmem:[%s1 + $0x244] sm:$0xf]
    %v182 = vld [vmem:[%s1 + $0x248] sm:$0xf]
    %v183 = vld [vmem:[%s1 + $0x24c] sm:$0xf]
    %v184 = vld [vmem:[%s1 + $0x250] sm:$0xf]
    %v185 = vld [vmem:[%s1 + $0x254] sm:$0xf]
    %v186 = vld [vmem:[%s1 + $0x258] sm:$0xf]
    %v187 = vld [vmem:[%s1 + $0x25c] sm:$0xf]
    %v188 = vld [vmem:[%s1 + $0x260] sm:$0xf]
    %v189 = vld [vmem:[%s1 + $0x264] sm:$0xf]
    %v190 = vld [vmem:[%s1 + $0x268] sm:$0xf]
    %v191 = vld [vmem:[%s1 + $0x26c] sm:$0xf]
    %v192 = vld [vmem:[%s1 + $0x270] sm:$0xf]
    %v193 = vld [vmem:[%s1 + $0x274] sm:$0xf]
    %v194 = vld [vmem:[%s1 + $0x278] sm:$0xf]
    %v195 = vld [vmem:[%s1 + $0x27c] sm:$0xf]
    %v196 = vld [vmem:[%s2] sm:$0x1]
    %v198 = vlaneseq
    %v199 = vshrl.u32 %v198, 7
    %v200 = vsub.s32 0, %v199
    %v201 = vrot.slane %v196, %v200
    %v363 = vunpack.c.l.b16 %v36
    %v364 = vunpack.c.l.b16 %v37
    %v365 = vunpack.c.l.b16 %v38
    %v366 = vunpack.c.l.b16 %v39
    %v367 = vunpack.c.l.b16 %v40
    %v368 = vunpack.c.l.b16 %v41
    %v369 = vunpack.c.l.b16 %v42
    %v370 = vunpack.c.l.b16 %v43
    %v371 = vunpack.c.l.b16 %v44
    %v372 = vunpack.c.l.b16 %v45
    %v373 = vunpack.c.l.b16 %v46
    %v374 = vunpack.c.l.b16 %v47
    %v375 = vunpack.c.l.b16 %v48
    %v376 = vunpack.c.l.b16 %v49
    %v377 = vunpack.c.l.b16 %v50
    %v378 = vunpack.c.l.b16 %v51
    %v379 = vunpack.c.l.b16 %v52
    %v380 = vunpack.c.l.b16 %v53
    %v381 = vunpack.c.l.b16 %v54
    %v382 = vunpack.c.l.b16 %v55
    %v383 = vunpack.c.l.b16 %v56
    %v384 = vunpack.c.l.b16 %v57
    %v385 = vunpack.c.l.b16 %v58
    %v386 = vunpack.c.l.b16 %v59
    %v387 = vunpack.c.l.b16 %v60
    %v388 = vunpack.c.l.b16 %v61
    %v389 = vunpack.c.l.b16 %v62
    %v390 = vunpack.c.l.b16 %v63
    %v391 = vunpack.c.l.b16 %v64
    %v392 = vunpack.c.l.b16 %v65
    %v393 = vunpack.c.l.b16 %v66
    %v394 = vunpack.c.l.b16 %v67
    %v395 = vunpack.c.l.b16 %v68
    %v396 = vunpack.c.l.b16 %v69
    %v397 = vunpack.c.l.b16 %v70
    %v398 = vunpack.c.l.b16 %v71
    %v399 = vunpack.c.l.b16 %v72
    %v400 = vunpack.c.l.b16 %v73
    %v401 = vunpack.c.l.b16 %v74
    %v402 = vunpack.c.l.b16 %v75
    %v403 = vunpack.c.l.b16 %v76
    %v404 = vunpack.c.l.b16 %v77
    %v405 = vunpack.c.l.b16 %v78
    %v406 = vunpack.c.l.b16 %v79
    %v407 = vunpack.c.l.b16 %v80
    %v408 = vunpack.c.l.b16 %v81
    %v409 = vunpack.c.l.b16 %v82
    %v410 = vunpack.c.l.b16 %v83
    %v411 = vunpack.c.l.b16 %v84
    %v412 = vunpack.c.l.b16 %v85
    %v413 = vunpack.c.l.b16 %v86
    %v414 = vunpack.c.l.b16 %v87
    %v415 = vunpack.c.l.b16 %v88
    %v416 = vunpack.c.l.b16 %v89
    %v417 = vunpack.c.l.b16 %v90
    %v418 = vunpack.c.l.b16 %v91
    %v419 = vunpack.c.l.b16 %v92
    %v420 = vunpack.c.l.b16 %v93
    %v421 = vunpack.c.l.b16 %v94
    %v422 = vunpack.c.l.b16 %v95
    %v423 = vunpack.c.l.b16 %v96
    %v424 = vunpack.c.l.b16 %v97
    %v425 = vunpack.c.l.b16 %v98
    %v426 = vunpack.c.l.b16 %v99
    %v427 = vunpack.c.l.b16 %v100
    %v428 = vunpack.c.l.b16 %v101
    %v429 = vunpack.c.l.b16 %v102
    %v430 = vunpack.c.l.b16 %v103
    %v431 = vunpack.c.l.b16 %v104
    %v432 = vunpack.c.l.b16 %v105
    %v433 = vunpack.c.l.b16 %v106
    %v434 = vunpack.c.l.b16 %v107
    %v435 = vunpack.c.l.b16 %v108
    %v436 = vunpack.c.l.b16 %v109
    %v437 = vunpack.c.l.b16 %v110
    %v438 = vunpack.c.l.b16 %v111
    %v439 = vunpack.c.l.b16 %v112
    %v440 = vunpack.c.l.b16 %v113
    %v441 = vunpack.c.l.b16 %v114
    %v442 = vunpack.c.l.b16 %v115
    %v443 = vunpack.c.l.b16 %v116
    %v444 = vunpack.c.l.b16 %v117
    %v445 = vunpack.c.l.b16 %v118
    %v446 = vunpack.c.l.b16 %v119
    %v447 = vunpack.c.l.b16 %v120
    %v448 = vunpack.c.l.b16 %v121
    %v449 = vunpack.c.l.b16 %v122
    %v450 = vunpack.c.l.b16 %v123
    %v451 = vunpack.c.l.b16 %v124
    %v452 = vunpack.c.l.b16 %v125
    %v453 = vunpack.c.l.b16 %v126
    %v454 = vunpack.c.l.b16 %v127
    %v455 = vunpack.c.l.b16 %v128
    %v456 = vunpack.c.l.b16 %v129
    %v457 = vunpack.c.l.b16 %v130
    %v458 = vunpack.c.l.b16 %v131
    %v459 = vunpack.c.l.b16 %v132
    %v460 = vunpack.c.l.b16 %v133
    %v461 = vunpack.c.l.b16 %v134
    %v462 = vunpack.c.l.b16 %v135
    %v463 = vunpack.c.l.b16 %v136
    %v464 = vunpack.c.l.b16 %v137
    %v465 = vunpack.c.l.b16 %v138
    %v466 = vunpack.c.l.b16 %v139
    %v467 = vunpack.c.l.b16 %v140
    %v468 = vunpack.c.l.b16 %v141
    %v469 = vunpack.c.l.b16 %v142
    %v470 = vunpack.c.l.b16 %v143
    %v471 = vunpack.c.l.b16 %v144
    %v472 = vunpack.c.l.b16 %v145
    %v473 = vunpack.c.l.b16 %v146
    %v474 = vunpack.c.l.b16 %v147
    %v475 = vunpack.c.l.b16 %v148
    %v476 = vunpack.c.l.b16 %v149
    %v477 = vunpack.c.l.b16 %v150
    %v478 = vunpack.c.l.b16 %v151
    %v479 = vunpack.c.l.b16 %v152
    %v480 = vunpack.c.l.b16 %v153
    %v481 = vunpack.c.l.b16 %v154
    %v482 = vunpack.c.l.b16 %v155
    %v483 = vunpack.c.l.b16 %v156
    %v484 = vunpack.c.l.b16 %v157
    %v485 = vunpack.c.l.b16 %v158
    %v486 = vunpack.c.l.b16 %v159
    %v487 = vunpack.c.l.b16 %v160
    %v488 = vunpack.c.l.b16 %v161
    %v489 = vunpack.c.l.b16 %v162
    %v490 = vunpack.c.l.b16 %v163
    %v491 = vunpack.c.l.b16 %v164
    %v492 = vunpack.c.l.b16 %v165
    %v493 = vunpack.c.l.b16 %v166
    %v494 = vunpack.c.l.b16 %v167
    %v495 = vunpack.c.l.b16 %v168
    %v496 = vunpack.c.l.b16 %v169
    %v497 = vunpack.c.l.b16 %v170
    %v498 = vunpack.c.l.b16 %v171
    %v499 = vunpack.c.l.b16 %v172
    %v500 = vunpack.c.l.b16 %v173
    %v501 = vunpack.c.l.b16 %v174
    %v502 = vunpack.c.l.b16 %v175
    %v503 = vunpack.c.l.b16 %v176
    %v504 = vunpack.c.l.b16 %v177
    %v505 = vunpack.c.l.b16 %v178
    %v506 = vunpack.c.l.b16 %v179
    %v507 = vunpack.c.l.b16 %v180
    %v508 = vunpack.c.l.b16 %v181
    %v509 = vunpack.c.l.b16 %v182
    %v510 = vunpack.c.l.b16 %v183
    %v511 = vunpack.c.l.b16 %v184
    %v512 = vunpack.c.l.b16 %v185
    %v513 = vunpack.c.l.b16 %v186
    %v514 = vunpack.c.l.b16 %v187
    %v515 = vunpack.c.l.b16 %v188
    %v516 = vunpack.c.l.b16 %v189
    %v517 = vunpack.c.l.b16 %v190
    %v518 = vunpack.c.l.b16 %v191
    %v519 = vunpack.c.l.b16 %v192
    %v520 = vunpack.c.l.b16 %v193
    %v521 = vunpack.c.l.b16 %v194
    %v522 = vunpack.c.l.b16 %v195
    %v523 = vpack.c.b16 %v364, %v363
    %v524 = vpack.c.b16 %v366, %v365
    %v525 = vpack.c.b16 %v368, %v367
    %v526 = vpack.c.b16 %v370, %v369
    %v527 = vpack.c.b16 %v372, %v371
    %v528 = vpack.c.b16 %v374, %v373
    %v529 = vpack.c.b16 %v376, %v375
    %v530 = vpack.c.b16 %v378, %v377
    %v531 = vpack.c.b16 %v380, %v379
    %v532 = vpack.c.b16 %v382, %v381
    %v533 = vpack.c.b16 %v384, %v383
    %v534 = vpack.c.b16 %v386, %v385
    %v535 = vpack.c.b16 %v388, %v387
    %v536 = vpack.c.b16 %v390, %v389
    %v537 = vpack.c.b16 %v392, %v391
    %v538 = vpack.c.b16 %v394, %v393
    %v539 = vpack.c.b16 %v396, %v395
    %v540 = vpack.c.b16 %v398, %v397
    %v541 = vpack.c.b16 %v400, %v399
    %v542 = vpack.c.b16 %v402, %v401
    %v543 = vpack.c.b16 %v404, %v403
    %v544 = vpack.c.b16 %v406, %v405
    %v545 = vpack.c.b16 %v408, %v407
    %v546 = vpack.c.b16 %v410, %v409
    %v547 = vpack.c.b16 %v412, %v411
    %v548 = vpack.c.b16 %v414, %v413
    %v549 = vpack.c.b16 %v416, %v415
    %v550 = vpack.c.b16 %v418, %v417
    %v551 = vpack.c.b16 %v420, %v419
    %v552 = vpack.c.b16 %v422, %v421
    %v553 = vpack.c.b16 %v424, %v423
    %v554 = vpack.c.b16 %v426, %v425
    %v555 = vpack.c.b16 %v428, %v427
    %v556 = vpack.c.b16 %v430, %v429
    %v557 = vpack.c.b16 %v432, %v431
    %v558 = vpack.c.b16 %v434, %v433
    %v559 = vpack.c.b16 %v436, %v435
    %v560 = vpack.c.b16 %v438, %v437
    %v561 = vpack.c.b16 %v440, %v439
    %v562 = vpack.c.b16 %v442, %v441
    %v563 = vpack.c.b16 %v444, %v443
    %v564 = vpack.c.b16 %v446, %v445
    %v565 = vpack.c.b16 %v448, %v447
    %v566 = vpack.c.b16 %v450, %v449
    %v567 = vpack.c.b16 %v452, %v451
    %v568 = vpack.c.b16 %v454, %v453
    %v569 = vpack.c.b16 %v456, %v455
    %v570 = vpack.c.b16 %v458, %v457
    %v571 = vpack.c.b16 %v460, %v459
    %v572 = vpack.c.b16 %v462, %v461
    %v573 = vpack.c.b16 %v464, %v463
    %v574 = vpack.c.b16 %v466, %v465
    %v575 = vpack.c.b16 %v468, %v467
    %v576 = vpack.c.b16 %v470, %v469
    %v577 = vpack.c.b16 %v472, %v471
    %v578 = vpack.c.b16 %v474, %v473
    %v579 = vpack.c.b16 %v476, %v475
    %v580 = vpack.c.b16 %v478, %v477
    %v581 = vpack.c.b16 %v480, %v479
    %v582 = vpack.c.b16 %v482, %v481
    %v583 = vpack.c.b16 %v484, %v483
    %v584 = vpack.c.b16 %v486, %v485
    %v585 = vpack.c.b16 %v488, %v487
    %v586 = vpack.c.b16 %v490, %v489
    %v587 = vpack.c.b16 %v492, %v491
    %v588 = vpack.c.b16 %v494, %v493
    %v589 = vpack.c.b16 %v496, %v495
    %v590 = vpack.c.b16 %v498, %v497
    %v591 = vpack.c.b16 %v500, %v499
    %v592 = vpack.c.b16 %v502, %v501
    %v593 = vpack.c.b16 %v504, %v503
    %v594 = vpack.c.b16 %v506, %v505
    %v595 = vpack.c.b16 %v508, %v507
    %v596 = vpack.c.b16 %v510, %v509
    %v597 = vpack.c.b16 %v512, %v511
    %v598 = vpack.c.b16 %v514, %v513
    %v599 = vpack.c.b16 %v516, %v515
    %v600 = vpack.c.b16 %v518, %v517
    %v601 = vpack.c.b16 %v520, %v519
    %v602 = vpack.c.b16 %v522, %v521
    %683 = vmatprep.subr.bf16.mxu0 0
    %684 = vmatpush1.bf16.msra.mxu0 %v523
    %685 = vmatprep.subr.bf16.mxu0 0
    %686 = vmatpush1.bf16.msra.mxu0 %v524
    %687 = vmatprep.subr.bf16.mxu0 0
    %688 = vmatpush1.bf16.msra.mxu0 %v525
    %689 = vmatprep.subr.bf16.mxu0 0
    %690 = vmatpush1.bf16.msra.mxu0 %v526
    %691 = vmatprep.subr.bf16.mxu0 0
    %692 = vmatpush1.bf16.msra.mxu0 %v527
    %693 = vmatprep.subr.bf16.mxu0 0
    %694 = vmatpush1.bf16.msra.mxu0 %v528
    %695 = vmatprep.subr.bf16.mxu0 0
    %696 = vmatpush1.bf16.msra.mxu0 %v529
    %697 = vmatprep.subr.bf16.mxu0 0
    %698 = vmatpush1.bf16.msra.mxu0 %v530
    %699 = vmatprep.subr.bf16.mxu0 0
    %700 = vmatpush1.bf16.msra.mxu0 %v531
    %701 = vmatprep.subr.bf16.mxu0 0
    %702 = vmatpush1.bf16.msra.mxu0 %v532
    %703 = vmatprep.subr.bf16.mxu0 0
    %704 = vmatpush1.bf16.msra.mxu0 %v533
    %705 = vmatprep.subr.bf16.mxu0 0
    %706 = vmatpush1.bf16.msra.mxu0 %v534
    %707 = vmatprep.subr.bf16.mxu0 0
    %708 = vmatpush1.bf16.msra.mxu0 %v535
    %709 = vmatprep.subr.bf16.mxu0 0
    %710 = vmatpush1.bf16.msra.mxu0 %v536
    %711 = vmatprep.subr.bf16.mxu0 0
    %712 = vmatpush1.bf16.msra.mxu0 %v537
    %713 = vmatprep.subr.bf16.mxu0 0
    %714 = vmatpush1.bf16.msra.mxu0 %v538
    %715 = vmatprep.mubr.bf16.mxu0 %v27
    %716 = vmatmul.mubr.bf16.gmra.mrb[0].mxu0 %v26
    %v717 = vpop.f32.mrb[0].mxu0
    %v718 = vadd.f32 %v201, %v717
    %v719 = vpop.f32.mrb[0].mxu0
    %v720 = vpop.f32.mrb[0].mxu0
    %v721 = vpop.f32.mrb[0].mxu0
    %722 = vdwg.mxu0
    %723 = vmatprep.subr.bf16.mxu0 0
    %724 = vmatpush1.bf16.msra.mxu0 %v539
    %725 = vmatprep.subr.bf16.mxu0 0
    %726 = vmatpush1.bf16.msra.mxu0 %v540
    %727 = vmatprep.subr.bf16.mxu0 0
    %728 = vmatpush1.bf16.msra.mxu0 %v541
    %729 = vmatprep.subr.bf16.mxu0 0
    %730 = vmatpush1.bf16.msra.mxu0 %v542
    %731 = vmatprep.subr.bf16.mxu0 0
    %732 = vmatpush1.bf16.msra.mxu0 %v543
    %733 = vmatprep.subr.bf16.mxu0 0
    %734 = vmatpush1.bf16.msra.mxu0 %v544
    %735 = vmatprep.subr.bf16.mxu0 0
    %736 = vmatpush1.bf16.msra.mxu0 %v545
    %737 = vmatprep.subr.bf16.mxu0 0
    %738 = vmatpush1.bf16.msra.mxu0 %v546
    %739 = vmatprep.subr.bf16.mxu0 0
    %740 = vmatpush1.bf16.msra.mxu0 %v547
    %741 = vmatprep.subr.bf16.mxu0 0
    %742 = vmatpush1.bf16.msra.mxu0 %v548
    %743 = vmatprep.subr.bf16.mxu0 0
    %744 = vmatpush1.bf16.msra.mxu0 %v549
    %745 = vmatprep.subr.bf16.mxu0 0
    %746 = vmatpush1.bf16.msra.mxu0 %v550
    %747 = vmatprep.subr.bf16.mxu0 0
    %748 = vmatpush1.bf16.msra.mxu0 %v551
    %749 = vmatprep.subr.bf16.mxu0 0
    %750 = vmatpush1.bf16.msra.mxu0 %v552
    %751 = vmatprep.subr.bf16.mxu0 0
    %752 = vmatpush1.bf16.msra.mxu0 %v553
    %753 = vmatprep.subr.bf16.mxu0 0
    %754 = vmatpush1.bf16.msra.mxu0 %v554
    %755 = vmatprep.mubr.bf16.mxu0 %v29
    %756 = vmatmul.mubr.bf16.gmra.mrb[0].mxu0 %v28
    %v757 = vpop.f32.mrb[0].mxu0
    %v758 = vadd.f32 %v718, %v757
    %v759 = vpop.f32.mrb[0].mxu0
    %v760 = vpop.f32.mrb[0].mxu0
    %v761 = vpop.f32.mrb[0].mxu0
    %762 = vdwg.mxu0
    %763 = vmatprep.subr.bf16.mxu0 0
    %764 = vmatpush1.bf16.msra.mxu0 %v555
    %765 = vmatprep.subr.bf16.mxu0 0
    %766 = vmatpush1.bf16.msra.mxu0 %v556
    %767 = vmatprep.subr.bf16.mxu0 0
    %768 = vmatpush1.bf16.msra.mxu0 %v557
    %769 = vmatprep.subr.bf16.mxu0 0
    %770 = vmatpush1.bf16.msra.mxu0 %v558
    %771 = vmatprep.subr.bf16.mxu0 0
    %772 = vmatpush1.bf16.msra.mxu0 %v559
    %773 = vmatprep.subr.bf16.mxu0 0
    %774 = vmatpush1.bf16.msra.mxu0 %v560
    %775 = vmatprep.subr.bf16.mxu0 0
    %776 = vmatpush1.bf16.msra.mxu0 %v561
    %777 = vmatprep.subr.bf16.mxu0 0
    %778 = vmatpush1.bf16.msra.mxu0 %v562
    %779 = vmatprep.subr.bf16.mxu0 0
    %780 = vmatpush1.bf16.msra.mxu0 %v563
    %781 = vmatprep.subr.bf16.mxu0 0
    %782 = vmatpush1.bf16.msra.mxu0 %v564
    %783 = vmatprep.subr.bf16.mxu0 0
    %784 = vmatpush1.bf16.msra.mxu0 %v565
    %785 = vmatprep.subr.bf16.mxu0 0
    %786 = vmatpush1.bf16.msra.mxu0 %v566
    %787 = vmatprep.subr.bf16.mxu0 0
    %788 = vmatpush1.bf16.msra.mxu0 %v567
    %789 = vmatprep.subr.bf16.mxu0 0
    %790 = vmatpush1.bf16.msra.mxu0 %v568
    %791 = vmatprep.subr.bf16.mxu0 0
    %792 = vmatpush1.bf16.msra.mxu0 %v569
    %793 = vmatprep.subr.bf16.mxu0 0
    %794 = vmatpush1.bf16.msra.mxu0 %v570
    %795 = vmatprep.mubr.bf16.mxu0 %v31
    %796 = vmatmul.mubr.bf16.gmra.mrb[0].mxu0 %v30
    %v797 = vpop.f32.mrb[0].mxu0
    %v798 = vadd.f32 %v758, %v797
    %v799 = vpop.f32.mrb[0].mxu0
    %v800 = vpop.f32.mrb[0].mxu0
    %v801 = vpop.f32.mrb[0].mxu0
    %802 = vdwg.mxu0
    %803 = vmatprep.subr.bf16.mxu0 0
    %804 = vmatpush1.bf16.msra.mxu0 %v571
    %805 = vmatprep.subr.bf16.mxu0 0
    %806 = vmatpush1.bf16.msra.mxu0 %v572
    %807 = vmatprep.subr.bf16.mxu0 0
    %808 = vmatpush1.bf16.msra.mxu0 %v573
    %809 = vmatprep.subr.bf16.mxu0 0
    %810 = vmatpush1.bf16.msra.mxu0 %v574
    %811 = vmatprep.subr.bf16.mxu0 0
    %812 = vmatpush1.bf16.msra.mxu0 %v575
    %813 = vmatprep.subr.bf16.mxu0 0
    %814 = vmatpush1.bf16.msra.mxu0 %v576
    %815 = vmatprep.subr.bf16.mxu0 0
    %816 = vmatpush1.bf16.msra.mxu0 %v577
    %817 = vmatprep.subr.bf16.mxu0 0
    %818 = vmatpush1.bf16.msra.mxu0 %v578
    %819 = vmatprep.subr.bf16.mxu0 0
    %820 = vmatpush1.bf16.msra.mxu0 %v579
    %821 = vmatprep.subr.bf16.mxu0 0
    %822 = vmatpush1.bf16.msra.mxu0 %v580
    %823 = vmatprep.subr.bf16.mxu0 0
    %824 = vmatpush1.bf16.msra.mxu0 %v581
    %825 = vmatprep.subr.bf16.mxu0 0
    %826 = vmatpush1.bf16.msra.mxu0 %v582
    %827 = vmatprep.subr.bf16.mxu0 0
    %828 = vmatpush1.bf16.msra.mxu0 %v583
    %829 = vmatprep.subr.bf16.mxu0 0
    %830 = vmatpush1.bf16.msra.mxu0 %v584
    %831 = vmatprep.subr.bf16.mxu0 0
    %832 = vmatpush1.bf16.msra.mxu0 %v585
    %833 = vmatprep.subr.bf16.mxu0 0
    %834 = vmatpush1.bf16.msra.mxu0 %v586
    %835 = vmatprep.mubr.bf16.mxu0 %v33
    %836 = vmatmul.mubr.bf16.gmra.mrb[0].mxu0 %v32
    %v837 = vpop.f32.mrb[0].mxu0
    %v838 = vadd.f32 %v798, %v837
    %v839 = vpop.f32.mrb[0].mxu0
    %v840 = vpop.f32.mrb[0].mxu0
    %v841 = vpop.f32.mrb[0].mxu0
    %842 = vdwg.mxu0
    %843 = vmatprep.subr.bf16.mxu0 0
    %844 = vmatpush1.bf16.msra.mxu0 %v587
    %845 = vmatprep.subr.bf16.mxu0 0
    %846 = vmatpush1.bf16.msra.mxu0 %v588
    %847 = vmatprep.subr.bf16.mxu0 0
    %848 = vmatpush1.bf16.msra.mxu0 %v589
    %849 = vmatprep.subr.bf16.mxu0 0
    %850 = vmatpush1.bf16.msra.mxu0 %v590
    %851 = vmatprep.subr.bf16.mxu0 0
    %852 = vmatpush1.bf16.msra.mxu0 %v591
    %853 = vmatprep.subr.bf16.mxu0 0
    %854 = vmatpush1.bf16.msra.mxu0 %v592
    %855 = vmatprep.subr.bf16.mxu0 0
    %856 = vmatpush1.bf16.msra.mxu0 %v593
    %857 = vmatprep.subr.bf16.mxu0 0
    %858 = vmatpush1.bf16.msra.mxu0 %v594
    %859 = vmatprep.subr.bf16.mxu0 0
    %860 = vmatpush1.bf16.msra.mxu0 %v595
    %861 = vmatprep.subr.bf16.mxu0 0
    %862 = vmatpush1.bf16.msra.mxu0 %v596
    %863 = vmatprep.subr.bf16.mxu0 0
    %864 = vmatpush1.bf16.msra.mxu0 %v597
    %865 = vmatprep.subr.bf16.mxu0 0
    %866 = vmatpush1.bf16.msra.mxu0 %v598
    %867 = vmatprep.subr.bf16.mxu0 0
    %868 = vmatpush1.bf16.msra.mxu0 %v599
    %869 = vmatprep.subr.bf16.mxu0 0
    %870 = vmatpush1.bf16.msra.mxu0 %v600
    %871 = vmatprep.subr.bf16.mxu0 0
    %872 = vmatpush1.bf16.msra.mxu0 %v601
    %873 = vmatprep.subr.bf16.mxu0 0
    %874 = vmatpush1.bf16.msra.mxu0 %v602
    %875 = vmatprep.mubr.bf16.mxu0 %v35
    %876 = vmatmul.mubr.bf16.gmra.mrb[0].mxu0 %v34
    %v877 = vpop.f32.mrb[0].mxu0
    %v878 = vadd.f32 %v838, %v877
    %v879 = vpop.f32.mrb[0].mxu0
    %v880 = vpop.f32.mrb[0].mxu0
    %v881 = vpop.f32.mrb[0].mxu0
    %882 = vdwg.mxu0
    %vm883 = vcmask 130048
    %884 = vst.msk [vmem:[#allocation2] sm:$0xff] %vm883, %v878
    // Predicated region
    $region14: #{tpu_custom_call.1} parent=1 // pred_check
      _
    $region15: #{tpu_custom_call.1} parent=1 // pred_check_branch
      %886 = sbr.rel (0) target = $region17
    $region16: #{tpu_custom_call.1} parent=1 // pred_region
      %s888 = ssub.s32 128, 128
      %889 = vsyncadd [#allocation3], %s888
      %s891 = sshll.u32 [#allocation2], 4
      %s892 = int_to_ptr.vmem [resolvable:$true] %s891
      %894 = dma.vmem_to_hbm [thread:$0]  %s892, 128, %s3, [#allocation3]
    $region17: #{tpu_custom_call.1} parent=1 // pred_fallthru
      _
    // Predicated region
    $region18: #{tpu_custom_call.1} parent=1 // pred_check
      _
    $region19: #{tpu_custom_call.1} parent=1 // pred_check_branch
      %896 = sbr.rel (0) target = $region21
    $region20: #{tpu_custom_call.1} parent=1 // pred_region
      %897 = dma.done [#allocation3], 128
    $region21: #{tpu_custom_call.1} parent=1 // pred_fallthru
      _
    %898 = vsyncpa [#allocation3], 1

</llo_original>
